<compile_context>
chip_gen: v6e
topology: v6e:2x2x1
jax: 0.10.0
libtpu: 0.0.40
codegen_flags: <defaults>
</compile_context>

<pallas_src>
import jax
import jax.numpy as jnp
from jax.experimental import pallas as pl
from jax.experimental.pallas import tpu as pltpu


# --------------------------------------------------------------------------- #
# Small host-side helpers
# --------------------------------------------------------------------------- #
def _round_up(n, m):
    return ((n + m - 1) // m) * m


def _cdiv(a, b):
    return (a + b - 1) // b


def _vmem_limit_bytes():
    """~75% of physical VMEM: 48 MiB on v7x (64 MiB/TC), 96 MiB on v5e/v6e."""
    try:
        cap = int(pltpu.get_tpu_info().vmem_capacity_bytes)
    except Exception:
        cap = 64 * 1024 * 1024                      # conservative (v7x) default
    lim = (cap * 3) // 4
    return int(min(max(lim, 48 * 1024 * 1024), 112 * 1024 * 1024))


def _pick_batch_tile(batch, dtype, block_b):
    """Batch tile: sublane-aligned, capped by block_b, split into >=2 tiles
    whenever B allows it so v7x's second TensorCore gets work."""
    sub = 8 if dtype == jnp.float32 else 16
    max_tb = _round_up(block_b, sub)
    half = _round_up(max(_cdiv(batch, 2), 1), sub)
    return max(sub, min(max_tb, half))


# --------------------------------------------------------------------------- #
# Kernels
# --------------------------------------------------------------------------- #
def _cge_kernel(x_ref, w_ref, b_ref, o_ref):
    """Resident-weight path: x tile (TB, D), full (D, D) weight stays in VMEM."""
    x = x_ref[...]                                        # (TB, D), native dtype
    # Linear with bias + eval-mode BN affine pre-folded into (W', b').
    x1 = jnp.dot(x, w_ref[...], preferred_element_type=jnp.float32)
    x1 = x1 + b_ref[...].astype(jnp.float32)              # (1, D) broadcast
    # GLU(cat(x, x1), dim=1) == x * sigmoid(x1)
    g = x.astype(jnp.float32) * jax.nn.sigmoid(x1)
    # F.normalize: y / max(||y||_2, 1e-12) == y * rsqrt(max(||y||^2, 1e-24))
    ss = jnp.sum(g * g, axis=-1, keepdims=True)
    inv = jax.lax.rsqrt(jnp.maximum(ss, 1e-24))
    o_ref[...] = (g * inv).astype(o_ref.dtype)


def _cge_kernel_ktiled(x_ref, w_ref, b_ref, o_ref, acc_ref):
    """K-tiled path: weight streamed as (tk, D) blocks; f32 VMEM accumulator.

    x is kept as a full (TB, D) row tile (constant-k index_map -> stays
    resident across the K loop); the matmul operand is an in-kernel K slice.
    """
    k = pl.program_id(1)
    tk = w_ref.shape[0]

    @pl.when(k == 0)
    def _init():
        acc_ref[...] = jnp.zeros_like(acc_ref)

    off = pl.multiple_of(k * tk, tk)
    xk = x_ref[:, pl.ds(off, tk)]                          # (TB, tk)
    acc_ref[...] += jnp.dot(xk, w_ref[...], preferred_element_type=jnp.float32)

    @pl.when(k == pl.num_programs(1) - 1)
    def _epilogue():
        x1 = acc_ref[...] + b_ref[...].astype(jnp.float32)
        g = x_ref[...].astype(jnp.float32) * jax.nn.sigmoid(x1)
        ss = jnp.sum(g * g, axis=-1, keepdims=True)
        inv = jax.lax.rsqrt(jnp.maximum(ss, 1e-24))
        o_ref[...] = (g * inv).astype(o_ref.dtype)


# --------------------------------------------------------------------------- #
# Parameter fold (one-time; hoisted out of the per-call path)
# --------------------------------------------------------------------------- #
def fold_params(w_t, b, bn_scale=None, bn_shift=None, weight_dtype=None):
    """Fold Linear bias + eval-mode BatchNorm1d into (W', b').

    w_t: (D_in, D_out) = Linear.weight.T.   b: (D,) or (1, D).
    bn_scale = gamma / sqrt(running_var + eps)
    bn_shift = beta - running_mean * bn_scale
    Pass bn_scale=None for use_bn=False.
    weight_dtype: optional (e.g. jnp.bfloat16) to halve HBM weight traffic.
    """
    b = jnp.reshape(b, (1, -1))
    if bn_scale is not None:
        bn_scale = jnp.reshape(bn_scale, (1, -1))
        bn_shift = jnp.reshape(bn_shift, (1, -1))
        w_eff = w_t * bn_scale                 # scale output columns
        b_eff = b * bn_scale + bn_shift
    else:
        w_eff, b_eff = w_t, b
    w_eff = w_eff.astype(weight_dtype if weight_dtype is not None else w_t.dtype)
    b_eff = b_eff.astype(jnp.float32)
    return w_eff, b_eff


# --------------------------------------------------------------------------- #
# pallas_call plumbing
# --------------------------------------------------------------------------- #
def _call(x, w_eff, b_eff, *, block_b, k_tile, single_buffer_params, vmem_limit):
    B, D = x.shape
    TB = _pick_batch_tile(B, x.dtype, block_b)
    nb = _cdiv(B, TB)                          # ragged last block is masked

    out_shape = jax.ShapeDtypeStruct((B, D), x.dtype)
    cost = pl.CostEstimate(
        flops=2 * B * D * D + 6 * B * D,
        transcendentals=B * D + B,             # sigmoid + per-row rsqrt
        bytes_accessed=(x.size * x.dtype.itemsize
                        + w_eff.size * w_eff.dtype.itemsize
                        + b_eff.size * b_eff.dtype.itemsize
                        + B * D * x.dtype.itemsize),
    )

    def resident_spec(shape, index_map):
        # Constant index_map -> fetched once; single-buffer it to save VMEM.
        if single_buffer_params:
            return pl.BlockSpec(shape, index_map, pipeline_mode=pl.Buffered(1))
        return pl.BlockSpec(shape, index_map)

    if k_tile is None:
        grid_spec = pltpu.PrefetchScalarGridSpec(
            num_scalar_prefetch=0,
            grid=(nb,),
            in_specs=[
                pl.BlockSpec((TB, D), lambda i: (i, 0)),     # streamed activations
                resident_spec((D, D), lambda i: (0, 0)),     # resident weight
                resident_spec((1, D), lambda i: (0, 0)),     # resident bias
            ],
            out_specs=pl.BlockSpec((TB, D), lambda i: (i, 0)),
        )
        return pl.pallas_call(
            _cge_kernel,
            out_shape=out_shape,
            grid_spec=grid_spec,
            compiler_params=pltpu.CompilerParams(
                dimension_semantics=("parallel",),
                vmem_limit_bytes=vmem_limit,
            ),
            cost_estimate=cost,
        )(x, w_eff, b_eff)

    # ---- K-tiled path (weight too big to stay resident, e.g. on v7x) --------
    assert D % k_tile == 0, "k_tile must divide the feature dimension"
    nk = D // k_tile
    grid_spec = pltpu.PrefetchScalarGridSpec(
        num_scalar_prefetch=0,
        grid=(nb, nk),
        in_specs=[
            pl.BlockSpec((TB, D), lambda i, k: (i, 0)),      # full x row, k-resident
            pl.BlockSpec((k_tile, D), lambda i, k: (k, 0)),  # streamed K slices of W'
            resident_spec((1, D), lambda i, k: (0, 0)),      # resident bias
        ],
        out_specs=pl.BlockSpec((TB, D), lambda i, k: (i, 0)),
        scratch_shapes=[pltpu.VMEM((TB, D), jnp.float32)],   # f32 accumulator
    )
    return pl.pallas_call(
        _cge_kernel_ktiled,
        out_shape=out_shape,
        grid_spec=grid_spec,
        compiler_params=pltpu.CompilerParams(
            dimension_semantics=("parallel", "arbitrary"),
            vmem_limit_bytes=vmem_limit,
        ),
        cost_estimate=cost,
    )(x, w_eff, b_eff)


def mimic_ce_gated_embedding_unit_folded(x, w_eff, b_eff, *, block_b=256,
                                         k_tile=None):
    """Apply the unit with pre-folded (W', b'). x: (B, D)."""
    B, D = x.shape
    vmem_limit = _vmem_limit_bytes()

    # Auto-select K tiling if the resident weight would hog VMEM (v7x: 64 MiB/TC).
    if k_tile is None and D % 128 == 0:
        w_bytes = D * D * w_eff.dtype.itemsize
        if w_bytes > (2 * vmem_limit) // 5:
            k_tile = 128
            for cand in (1024, 512, 256):
                if D % cand == 0 and 2 * cand * D * w_eff.dtype.itemsize <= vmem_limit // 4:
                    k_tile = cand
                    break
    # TODO(synk): a VMEM-oversized weight with D % 128 != 0 falls back to the
    # resident path (no K tiling) and may exceed the VMEM budget.

    try:
        return _call(x, w_eff, b_eff, block_b=block_b, k_tile=k_tile,
                     single_buffer_params=True, vmem_limit=vmem_limit)
    except Exception:
        # Fallback if this JAX build rejects pipeline_mode=pl.Buffered(1).
        return _call(x, w_eff, b_eff, block_b=block_b, k_tile=k_tile,
                     single_buffer_params=False, vmem_limit=vmem_limit)


def make_mimic_ce_gated_embedding_unit(w_t, b, bn_scale=None, bn_shift=None, *,
                                       weight_dtype=None, block_b=256,
                                       k_tile=None):
    """Factory: folds parameters ONCE and returns an x -> y callable."""
    w_eff, b_eff = fold_params(w_t, b, bn_scale, bn_shift, weight_dtype)

    def apply(x):
        return mimic_ce_gated_embedding_unit_folded(
            x, w_eff, b_eff, block_b=block_b, k_tile=k_tile)

    return apply


def mimic_ce_gated_embedding_unit(x, w_t, b, bn_scale=None, bn_shift=None,
                                  *, block_b=256, weight_dtype=None, k_tile=None):
    """Convenience wrapper (folds per call; prefer the factory for hot paths)."""
    w_eff, b_eff = fold_params(w_t, b, bn_scale, bn_shift, weight_dtype)
    return mimic_ce_gated_embedding_unit_folded(
        x, w_eff, b_eff, block_b=block_b, k_tile=k_tile)


# --------------------------------------------------------------------------- #
# Tests
# --------------------------------------------------------------------------- #
if __name__ == "__main__":
    key = jax.random.PRNGKey(0)
    kx, kw, kb, kg, kbt, km, kv, kx2, kw2, kb2 = jax.random.split(key, 10)

    # ---------------- Test 1: resident-weight path, use_bn=True --------------
    B, D = 8, 32                      # input_dimension = output_dimension = 32
    x = jax.random.normal(kx, (B, D), dtype=jnp.float32)

    # Linear(D, D): weight (D_out, D_in) -> pass transposed (D_in, D_out)
    w = jax.random.normal(kw, (D, D), dtype=jnp.float32) * (1.0 / jnp.sqrt(D))
    b = jax.random.normal(kb, (1, D), dtype=jnp.float32) * 0.1
    w_t = w.T

    # BatchNorm1d(D) eval-mode params, folded to scale/shift
    gamma = 1.0 + 0.1 * jax.random.normal(kg, (1, D), dtype=jnp.float32)
    beta = 0.1 * jax.random.normal(kbt, (1, D), dtype=jnp.float32)
    run_mean = 0.1 * jax.random.normal(km, (1, D), dtype=jnp.float32)
    run_var = jnp.abs(jax.random.normal(kv, (1, D), dtype=jnp.float32)) + 0.5
    eps = 1e-5
    bn_scale = gamma / jnp.sqrt(run_var + eps)
    bn_shift = beta - run_mean * bn_scale

    unit = make_mimic_ce_gated_embedding_unit(w_t, b, bn_scale, bn_shift)
    out = jax.block_until_ready(unit(x))
    assert out.shape == (B, D)

    # (1a) Tight check vs a JAX reference using the same folded parameters.
    w_eff = w_t * bn_scale
    b_eff = b * bn_scale + bn_shift
    g = x * jax.nn.sigmoid(x @ w_eff + b_eff)
    ref_folded = g / jnp.maximum(
        jnp.sqrt(jnp.sum(g * g, axis=-1, keepdims=True)), 1e-12)
    assert jnp.allclose(out, ref_folded, atol=2e-5, rtol=2e-5), \
        "mismatch vs folded reference"

    # (1b) Module-faithful reference (bias/BN applied after the matmul);
    #      tolerance covers MXU default-precision reassociation.
    x1 = (x @ w_t + b) * bn_scale + bn_shift
    g2 = x * jax.nn.sigmoid(x1)
    ref_mod = g2 / jnp.maximum(
        jnp.sqrt(jnp.sum(g2 * g2, axis=-1, keepdims=True)), 1e-12)
    assert jnp.allclose(out, ref_mod, atol=5e-3, rtol=5e-3), \
        "mismatch vs module-faithful reference"

    # ---------- Test 2: K-tiled path + ragged batch edge, use_bn=False -------
    B2, D2 = 24, 256                  # TB=16 -> 2 batch tiles (one ragged)
    x2 = jax.random.normal(kx2, (B2, D2), dtype=jnp.float32)
    w2 = jax.random.normal(kw2, (D2, D2), dtype=jnp.float32) * (1.0 / jnp.sqrt(D2))
    b2 = jax.random.normal(kb2, (1, D2), dtype=jnp.float32) * 0.1
    w2_t = w2.T

    unit2 = make_mimic_ce_gated_embedding_unit(w2_t, b2, None, None, k_tile=128)
    out2 = jax.block_until_ready(unit2(x2))
    assert out2.shape == (B2, D2)

    g3 = x2 * jax.nn.sigmoid(x2 @ w2_t + b2)
    ref2 = g3 / jnp.maximum(
        jnp.sqrt(jnp.sum(g3 * g3, axis=-1, keepdims=True)), 1e-12)
    assert jnp.allclose(out2, ref2, atol=1e-4, rtol=1e-4), \
        "mismatch vs reference (K-tiled path)"

    print("KERNEL_OK")
</pallas_src>

<mosaic_0001>
module attributes {stable_mosaic.version = 11 : i64} {
  func.func @_cge_kernel(%arg0: i32, %arg1: memref<8x32xf32, #tpu.memory_space<vmem>>, %arg2: memref<32x32xf32, #tpu.memory_space<vmem>>, %arg3: memref<1x32xf32, #tpu.memory_space<vmem>>, %arg4: memref<8x32xf32, #tpu.memory_space<vmem>>) attributes {dimension_semantics = [#tpu.dimension_semantics<parallel>], iteration_bounds = array<i64: 1>, scalar_prefetch = 0 : i64, scratch_operands = 0 : i64, tpu.core_type = #tpu.core_type<tc>, window_params = [{transform_indices = @transform_0, window_bounds = array<i64: 8, 32>}, {pipeline_mode = #tpu.pipeline_mode<synchronous>, transform_indices = @transform_1, window_bounds = array<i64: 32, 32>}, {pipeline_mode = #tpu.pipeline_mode<synchronous>, transform_indices = @transform_2, window_bounds = array<i64: 1, 32>}, {transform_indices = @transform_3, window_bounds = array<i64: 8, 32>}]} {
    %c0 = arith.constant 0 : index
    %c0_0 = arith.constant 0 : index
    %0 = vector.load %arg1[%c0, %c0_0] : memref<8x32xf32, #tpu.memory_space<vmem>>, vector<8x32xf32>
    %c0_1 = arith.constant 0 : index
    %c0_2 = arith.constant 0 : index
    %1 = vector.load %arg2[%c0_1, %c0_2] : memref<32x32xf32, #tpu.memory_space<vmem>>, vector<32x32xf32>
    %cst = arith.constant dense<0.000000e+00> : vector<8x32xf32>
    %2 = tpu.matmul %0, %1, %cst {dimension_numbers = #tpu.dot_dimension_numbers<[1], [0], [0], [1], [0, 0, 1, 1], [], []>} : vector<8x32xf32>, vector<32x32xf32>, vector<8x32xf32> -> vector<8x32xf32>
    %c0_3 = arith.constant 0 : index
    %c0_4 = arith.constant 0 : index
    %3 = vector.load %arg3[%c0_3, %c0_4] : memref<1x32xf32, #tpu.memory_space<vmem>>, vector<1x32xf32>
    %4 = vector.broadcast %3 : vector<1x32xf32> to vector<8x32xf32>
    %5 = arith.addf %2, %4 : vector<8x32xf32>
    %6 = arith.negf %5 : vector<8x32xf32>
    %7 = math.exp %6 : vector<8x32xf32>
    %cst_5 = arith.constant 1.000000e+00 : f32
    %8 = vector.broadcast %cst_5 : f32 to vector<8x32xf32>
    %9 = arith.addf %8, %7 : vector<8x32xf32>
    %10 = arith.divf %8, %9 : vector<8x32xf32>
    %11 = arith.mulf %0, %10 : vector<8x32xf32>
    %12 = arith.mulf %11, %11 : vector<8x32xf32>
    %cst_6 = arith.constant dense<0.000000e+00> : vector<8xf32>
    %13 = vector.multi_reduction <add>, %12, %cst_6 [1] : vector<8x32xf32> to vector<8xf32>
    %14 = vector.shape_cast %13 : vector<8xf32> to vector<8x1xf32>
    %cst_7 = arith.constant 1.000000e-24 : f32
    %15 = vector.broadcast %cst_7 : f32 to vector<8x1xf32>
    %16 = arith.maximumf %14, %15 : vector<8x1xf32>
    %17 = math.rsqrt %16 : vector<8x1xf32>
    %18 = vector.broadcast %17 : vector<8x1xf32> to vector<8x32xf32>
    %19 = arith.mulf %11, %18 : vector<8x32xf32>
    %c0_8 = arith.constant 0 : index
    %c0_9 = arith.constant 0 : index
    %20 = vector.load %arg4[%c0_8, %c0_9] : memref<8x32xf32, #tpu.memory_space<vmem>>, vector<8x32xf32>
    tpu.vector_store %arg4[%c0_8, %c0_9], %19 {strides = array<i32>} : memref<8x32xf32, #tpu.memory_space<vmem>>, vector<8x32xf32>,
    return
  }
  func.func @transform_0(%arg0: i32) -> (i32, i32) {
    %c0_i32 = arith.constant 0 : i32
    %c0_i32_0 = arith.constant 0 : i32
    return %arg0, %c0_i32 : i32, i32
  }
  func.func @transform_1(%arg0: i32) -> (i32, i32) {
    %c0_i32 = arith.constant 0 : i32
    %c0_i32_0 = arith.constant 0 : i32
    %c0_i32_1 = arith.constant 0 : i32
    return %c0_i32, %c0_i32_0 : i32, i32
  }
  func.func @transform_2(%arg0: i32) -> (i32, i32) {
    %c0_i32 = arith.constant 0 : i32
    %c0_i32_0 = arith.constant 0 : i32
    %c0_i32_1 = arith.constant 0 : i32
    return %c0_i32, %c0_i32_0 : i32, i32
  }
  func.func @transform_3(%arg0: i32) -> (i32, i32) {
    %c0_i32 = arith.constant 0 : i32
    %c0_i32_0 = arith.constant 0 : i32
    return %arg0, %c0_i32 : i32, i32
  }
}

module attributes {stable_mosaic.version = 11 : i64} {
  func.func @_cge_kernel(%arg0: i32, %arg1: memref<8x32xf32, #tpu.memory_space<vmem>>, %arg2: memref<32x32xf32, #tpu.memory_space<vmem>>, %arg3: memref<1x32xf32, #tpu.memory_space<vmem>>, %arg4: memref<8x32xf32, #tpu.memory_space<vmem>>) attributes {dimension_semantics = [#tpu.dimension_semantics<parallel>], iteration_bounds = array<i64: 1>, scalar_prefetch = 0 : i64, scratch_operands = 0 : i64, tpu.core_type = #tpu.core_type<tc>, window_params = [{transform_indices = @transform_0, window_bounds = array<i64: 8, 32>}, {pipeline_mode = #tpu.pipeline_mode<synchronous>, transform_indices = @transform_1, window_bounds = array<i64: 32, 32>}, {pipeline_mode = #tpu.pipeline_mode<synchronous>, transform_indices = @transform_2, window_bounds = array<i64: 1, 32>}, {transform_indices = @transform_3, window_bounds = array<i64: 8, 32>}]} {
    %c0 = arith.constant 0 : index
    %c0_0 = arith.constant 0 : index
    %0 = vector.load %arg1[%c0, %c0_0] : memref<8x32xf32, #tpu.memory_space<vmem>>, vector<8x32xf32>
    %c0_1 = arith.constant 0 : index
    %c0_2 = arith.constant 0 : index
    %1 = vector.load %arg2[%c0_1, %c0_2] : memref<32x32xf32, #tpu.memory_space<vmem>>, vector<32x32xf32>
    %cst = arith.constant dense<0.000000e+00> : vector<8x32xf32>
    %2 = tpu.matmul %0, %1, %cst {dimension_numbers = #tpu.dot_dimension_numbers<[1], [0], [0], [1], [0, 0, 1, 1], [], []>} : vector<8x32xf32>, vector<32x32xf32>, vector<8x32xf32> -> vector<8x32xf32>
    %c0_3 = arith.constant 0 : index
    %c0_4 = arith.constant 0 : index
    %3 = vector.load %arg3[%c0_3, %c0_4] : memref<1x32xf32, #tpu.memory_space<vmem>>, vector<1x32xf32>
    %4 = vector.broadcast %3 : vector<1x32xf32> to vector<8x32xf32>
    %5 = arith.addf %2, %4 : vector<8x32xf32>
    %6 = arith.negf %5 : vector<8x32xf32>
    %7 = math.exp %6 : vector<8x32xf32>
    %cst_5 = arith.constant 1.000000e+00 : f32
    %8 = vector.broadcast %cst_5 : f32 to vector<8x32xf32>
    %9 = arith.addf %8, %7 : vector<8x32xf32>
    %10 = arith.divf %8, %9 : vector<8x32xf32>
    %11 = arith.mulf %0, %10 : vector<8x32xf32>
    %12 = arith.mulf %11, %11 : vector<8x32xf32>
    %cst_6 = arith.constant dense<0.000000e+00> : vector<8xf32>
    %13 = vector.multi_reduction <add>, %12, %cst_6 [1] : vector<8x32xf32> to vector<8xf32>
    %14 = vector.shape_cast %13 : vector<8xf32> to vector<8x1xf32>
    %cst_7 = arith.constant 1.000000e-24 : f32
    %15 = vector.broadcast %cst_7 : f32 to vector<8x1xf32>
    %16 = arith.maximumf %14, %15 : vector<8x1xf32>
    %17 = math.rsqrt %16 : vector<8x1xf32>
    %18 = vector.broadcast %17 : vector<8x1xf32> to vector<8x32xf32>
    %19 = arith.mulf %11, %18 : vector<8x32xf32>
    %c0_8 = arith.constant 0 : index
    %c0_9 = arith.constant 0 : index
    %20 = vector.load %arg4[%c0_8, %c0_9] : memref<8x32xf32, #tpu.memory_space<vmem>>, vector<8x32xf32>
    tpu.vector_store %arg4[%c0_8, %c0_9], %19 {strides = array<i32>} : memref<8x32xf32, #tpu.memory_space<vmem>>, vector<8x32xf32>,
    return
  }
  func.func @transform_0(%arg0: i32) -> (i32, i32) {
    %c0_i32 = arith.constant 0 : i32
    %c0_i32_0 = arith.constant 0 : i32
    return %arg0, %c0_i32 : i32, i32
  }
  func.func @transform_1(%arg0: i32) -> (i32, i32) {
    %c0_i32 = arith.constant 0 : i32
    %c0_i32_0 = arith.constant 0 : i32
    %c0_i32_1 = arith.constant 0 : i32
    return %c0_i32, %c0_i32_0 : i32, i32
  }
  func.func @transform_2(%arg0: i32) -> (i32, i32) {
    %c0_i32 = arith.constant 0 : i32
    %c0_i32_0 = arith.constant 0 : i32
    %c0_i32_1 = arith.constant 0 : i32
    return %c0_i32, %c0_i32_0 : i32, i32
  }
  func.func @transform_3(%arg0: i32) -> (i32, i32) {
    %c0_i32 = arith.constant 0 : i32
    %c0_i32_0 = arith.constant 0 : i32
    return %arg0, %c0_i32 : i32, i32
  }
}

</mosaic_0001>

<llo_original>
// kernel: tpu_custom_call.1
$region0: #{tpu_custom_call.1}
  #allocation0 [shape = 'u32[]', space=smem, size = 0x4, offset = 0x4, fixed_abs, tag = 'smem constant byte address 0x4 - core index']
  #allocation1 [shape = 'u32[144,128]{1,0:T(1,128)}', space=vmem, size = 0x12000, scoped, tag = 'internal scratch']
  %s0 = inlined_call_operand.hbm [shape: f32[8,32], index: 0, kind: input, shape index: {}]
  %s1 = inlined_call_operand.hbm [shape: f32[32,32], index: 1, kind: input, shape index: {}]
  %s2 = inlined_call_operand.vmem [shape: f32[1,32], index: 2, kind: input, shape index: {}]
  %s3 = inlined_call_operand.hbm [shape: f32[8,32], index: 3, kind: output, shape index: {}]
  %s4 = sld [smem:[#allocation0]]
  $region30: #{tpu_custom_call.1} parent=0
    _
  %s6 = ssub.s32 1, %s4
  %s7 = scalar_select 0, %s6, %s4
  $region1: #{tpu_custom_call.1} parent=0
    #allocation2 [shape = 'u8[4096]{0}', space=vmem, size = 0x1000, scoped, tag = 'input window, operand 0, single buffered']
    #allocation3 [shape = 's32[1]{0}', space=sflag, size = 0x4, scoped, tag = 'scoped memory for tpu_custom_call.1']
    #allocation4 [shape = 's32[1]{0}', space=sflag, size = 0x4, scoped, tag = 'scoped memory for tpu_custom_call.1']
    #allocation5 [shape = 'u8[16384]{0}', space=vmem, size = 0x4000, scoped, tag = 'input window, operand 1, single buffered']
    #allocation6 [shape = 's32[1]{0}', space=sflag, size = 0x4, scoped, tag = 'scoped memory for tpu_custom_call.1']
    #allocation7 [shape = 'u8[4096]{0}', space=vmem, size = 0x1000, scoped, tag = 'output window, operand 0, single buffered']
    %8 = vsyncpa [#allocation3], 0
    %9 = vsyncpa [#allocation6], 0
    %10 = vsyncpa [#allocation4], 0
    // Predicated region
    $region2: #{tpu_custom_call.1} parent=1 // pred_check
      _
    $region3: #{tpu_custom_call.1} parent=1 // pred_check_branch
      %12 = sbr.rel (0) target = $region5
    $region4: #{tpu_custom_call.1} parent=1 // pred_region
      %s14 = ssub.s32 128, 128
      %15 = vsyncadd [#allocation3], %s14
      %s17 = sshll.u32 [#allocation2], 4
      %s18 = int_to_ptr.vmem [resolvable:$true] %s17
      %20 = dma.hbm_to_vmem [thread:$0]  %s0, 128, %s18, [#allocation3]
    $region5: #{tpu_custom_call.1} parent=1 // pred_fallthru
      _
    // Predicated region
    $region6: #{tpu_custom_call.1} parent=1 // pred_check
      _
    $region7: #{tpu_custom_call.1} parent=1 // pred_check_branch
      %22 = sbr.rel (0) target = $region9
    $region8: #{tpu_custom_call.1} parent=1 // pred_region
      %s24 = ssub.s32 512, 512
      %25 = vsyncadd [#allocation6], %s24
      %s26 = sshll.u32 [#allocation5], 4
      %s27 = int_to_ptr.vmem [resolvable:$true] %s26
      %32 = dma.hbm_to_vmem [thread:$0]  %s1, 512, %s27, [#allocation6], 128, 128, 8
    $region9: #{tpu_custom_call.1} parent=1 // pred_fallthru
      _
    // Predicated region
    $region10: #{tpu_custom_call.1} parent=1 // pred_check
      _
    $region11: #{tpu_custom_call.1} parent=1 // pred_check_branch
      %34 = sbr.rel (0) target = $region13
    $region12: #{tpu_custom_call.1} parent=1 // pred_region
      _
    $region13: #{tpu_custom_call.1} parent=1 // pred_fallthru
      _
    // Predicated region
    $region14: #{tpu_custom_call.1} parent=1 // pred_check
      _
    $region15: #{tpu_custom_call.1} parent=1 // pred_check_branch
      %36 = sbr.rel (0) target = $region17
    $region16: #{tpu_custom_call.1} parent=1 // pred_region
      %37 = dma.done [#allocation3], 128
    $region17: #{tpu_custom_call.1} parent=1 // pred_fallthru
      _
    // Predicated region
    $region18: #{tpu_custom_call.1} parent=1 // pred_check
      _
    $region19: #{tpu_custom_call.1} parent=1 // pred_check_branch
      %39 = sbr.rel (0) target = $region21
    $region20: #{tpu_custom_call.1} parent=1 // pred_region
      %40 = dma.done [#allocation6], 512
    $region21: #{tpu_custom_call.1} parent=1 // pred_fallthru
      _
    %v41 = vld [vmem:[#allocation2] sm:$0xff]
    %v42 = vld [vmem:[#allocation5] sm:$0xff]
    %v43 = vld [vmem:[#allocation5 + $0x8] sm:$0xff]
    %v44 = vld [vmem:[#allocation5 + $0x10] sm:$0xff]
    %v45 = vld [vmem:[#allocation5 + $0x18] sm:$0xff]
    %v46 = vld [vmem:[%s2] sm:$0x1]
    %v48 = vlaneseq
    %v49 = vshrl.u32 %v48, 7
    %v50 = vsub.s32 0, %v49
    %v51 = vrot.slane %v46, %v50
    %vm53 = vcmask 261120
    %v55 = vsel %vm53, %v41, 0
    %57 = vmatprep.subr.mxu0 0.0
    %58 = vmatpush1.msra.mxu0 0.0
    %59 = vmatprep.subr.mxu0 0.0
    %60 = vmatpush1.msra.mxu0 0.0
    %61 = vmatprep.subr.mxu0 0.0
    %62 = vmatpush1.msra.mxu0 0.0
    %63 = vmatprep.subr.mxu0 0.0
    %64 = vmatpush1.msra.mxu0 0.0
    %65 = vmatprep.subr.mxu0 0.0
    %66 = vmatpush1.msra.mxu0 0.0
    %67 = vmatprep.subr.mxu0 0.0
    %68 = vmatpush1.msra.mxu0 0.0
    %69 = vmatprep.subr.mxu0 0.0
    %70 = vmatpush1.msra.mxu0 0.0
    %71 = vmatprep.subr.mxu0 0.0
    %72 = vmatpush1.msra.mxu0 0.0
    %73 = vmatprep.subr.mxu0 0.0
    %74 = vmatpush1.msra.mxu0 0.0
    %75 = vmatprep.subr.mxu0 0.0
    %76 = vmatpush1.msra.mxu0 0.0
    %77 = vmatprep.subr.mxu0 0.0
    %78 = vmatpush1.msra.mxu0 0.0
    %79 = vmatprep.subr.mxu0 0.0
    %80 = vmatpush1.msra.mxu0 0.0
    %81 = vmatprep.subr.mxu0 0.0
    %82 = vmatpush1.msra.mxu0 %v45
    %83 = vmatprep.subr.mxu0 0.0
    %84 = vmatpush1.msra.mxu0 %v44
    %85 = vmatprep.subr.mxu0 0.0
    %86 = vmatpush1.msra.mxu0 %v43
    %87 = vmatprep.subr.mxu0 0.0
    %88 = vmatpush1.msra.mxu0 %v42
    %89 = vmatprep.subr.mxu0 0.0
    %90 = vmatpush2.msra.mxu0 0.0
    %91 = vmatprep.subr.mxu0 0.0
    %92 = vmatpush2.msra.mxu0 0.0
    %93 = vmatprep.subr.mxu0 0.0
    %94 = vmatpush2.msra.mxu0 0.0
    %95 = vmatprep.subr.mxu0 0.0
    %96 = vmatpush2.msra.mxu0 0.0
    %97 = vmatprep.subr.mxu0 0.0
    %98 = vmatpush2.msra.mxu0 0.0
    %99 = vmatprep.subr.mxu0 0.0
    %100 = vmatpush2.msra.mxu0 0.0
    %101 = vmatprep.subr.mxu0 0.0
    %102 = vmatpush2.msra.mxu0 0.0
    %103 = vmatprep.subr.mxu0 0.0
    %104 = vmatpush2.msra.mxu0 0.0
    %105 = vmatprep.subr.mxu0 0.0
    %106 = vmatpush2.msra.mxu0 0.0
    %107 = vmatprep.subr.mxu0 0.0
    %108 = vmatpush2.msra.mxu0 0.0
    %109 = vmatprep.subr.mxu0 0.0
    %110 = vmatpush2.msra.mxu0 0.0
    %111 = vmatprep.subr.mxu0 0.0
    %112 = vmatpush2.msra.mxu0 0.0
    %113 = vmatprep.subr.mxu0 0.0
    %114 = vmatpush2.msra.mxu0 0.0
    %115 = vmatprep.subr.mxu0 0.0
    %116 = vmatpush2.msra.mxu0 0.0
    %117 = vmatprep.subr.mxu0 0.0
    %118 = vmatpush2.msra.mxu0 0.0
    %119 = vmatprep.subr.mxu0 0.0
    %120 = vmatpush2.msra.mxu0 0.0
    %121 = vmatprep.mubr.f32.mxu0 0.0
    %122 = vmatmul.mubr.f32.gmra.mxu0 %v55
    %v123 = vpop.f32.mrf.mxu0
    %v124 = vadd.f32 %v51, %v123
    %v125 = vpop.f32.mrf.mxu0
    %126 = vdwg.mxu0
    %v127 = vxor.u32 %v124, 2147483648
    %v128 = vmul.f32 %v127, 1.442695
    %v129 = vpow.pop %v128
    %v130 = vadd.f32 %v129, 1.0
    %v131 = vrcp.pop %v130
    %v132 = vmul.f32 1.0, %v131
    %v133 = vmul.f32 %v41, %v132
    %v134 = vmul.f32 %v133, %v133
    %v135 = vsel %vm53, %v134, 0.0
    %136 = vadd.xlane.f32.xlu0 %v135
    %v137 = vpop.xlane.xlu0 %136
    %v138 = vmax.f32 %v137, 1e-24
    %v139 = vrsqrt.pop %v138
    %v140 = vmul.f32 %v133, %v139
    %141 = vst.msk [vmem:[#allocation7] sm:$0xff] %vm53, %v140
    // Predicated region
    $region22: #{tpu_custom_call.1} parent=1 // pred_check
      _
    $region23: #{tpu_custom_call.1} parent=1 // pred_check_branch
      %143 = sbr.rel (0) target = $region25
    $region24: #{tpu_custom_call.1} parent=1 // pred_region
      %s145 = ssub.s32 128, 128
      %146 = vsyncadd [#allocation4], %s145
      %s148 = sshll.u32 [#allocation7], 4
      %s149 = int_to_ptr.vmem [resolvable:$true] %s148
      %151 = dma.vmem_to_hbm [thread:$0]  %s149, 128, %s3, [#allocation4]
    $region25: #{tpu_custom_call.1} parent=1 // pred_fallthru
      _
    // Predicated region
    $region26: #{tpu_custom_call.1} parent=1 // pred_check
      _
    $region27: #{tpu_custom_call.1} parent=1 // pred_check_branch
      %153 = sbr.rel (0) target = $region29
    $region28: #{tpu_custom_call.1} parent=1 // pred_region
      %154 = dma.done [#allocation4], 128
    $region29: #{tpu_custom_call.1} parent=1 // pred_fallthru
      _
    %155 = vsyncpa [#allocation3], 1
    %156 = vsyncpa [#allocation6], 1
    %157 = vsyncpa [#allocation4], 1

// kernel: tpu_custom_call.1
$region0: #{tpu_custom_call.1}
  #allocation0 [shape = 'u32[]', space=smem, size = 0x4, offset = 0x4, fixed_abs, tag = 'smem constant byte address 0x4 - core index']
  #allocation1 [shape = 'u32[144,128]{1,0:T(1,128)}', space=vmem, size = 0x12000, scoped, tag = 'internal scratch']
  %s0 = inlined_call_operand.hbm [shape: f32[8,32], index: 0, kind: input, shape index: {}]
  %s1 = inlined_call_operand.hbm [shape: f32[32,32], index: 1, kind: input, shape index: {}]
  %s2 = inlined_call_operand.vmem [shape: f32[1,32], index: 2, kind: input, shape index: {}]
  %s3 = inlined_call_operand.hbm [shape: f32[8,32], index: 3, kind: output, shape index: {}]
  %s4 = sld [smem:[#allocation0]]
  $region30: #{tpu_custom_call.1} parent=0
    _
  %s6 = ssub.s32 1, %s4
  %s7 = scalar_select 0, %s6, %s4
  $region1: #{tpu_custom_call.1} parent=0
    #allocation2 [shape = 'u8[4096]{0}', space=vmem, size = 0x1000, scoped, tag = 'input window, operand 0, single buffered']
    #allocation3 [shape = 's32[1]{0}', space=sflag, size = 0x4, scoped, tag = 'scoped memory for tpu_custom_call.1']
    #allocation4 [shape = 's32[1]{0}', space=sflag, size = 0x4, scoped, tag = 'scoped memory for tpu_custom_call.1']
    #allocation5 [shape = 'u8[16384]{0}', space=vmem, size = 0x4000, scoped, tag = 'input window, operand 1, single buffered']
    #allocation6 [shape = 's32[1]{0}', space=sflag, size = 0x4, scoped, tag = 'scoped memory for tpu_custom_call.1']
    #allocation7 [shape = 'u8[4096]{0}', space=vmem, size = 0x1000, scoped, tag = 'output window, operand 0, single buffered']
    %8 = vsyncpa [#allocation3], 0
    %9 = vsyncpa [#allocation6], 0
    %10 = vsyncpa [#allocation4], 0
    // Predicated region
    $region2: #{tpu_custom_call.1} parent=1 // pred_check
      _
    $region3: #{tpu_custom_call.1} parent=1 // pred_check_branch
      %12 = sbr.rel (0) target = $region5
    $region4: #{tpu_custom_call.1} parent=1 // pred_region
      %s14 = ssub.s32 128, 128
      %15 = vsyncadd [#allocation3], %s14
      %s17 = sshll.u32 [#allocation2], 4
      %s18 = int_to_ptr.vmem [resolvable:$true] %s17
      %20 = dma.hbm_to_vmem [thread:$0]  %s0, 128, %s18, [#allocation3]
    $region5: #{tpu_custom_call.1} parent=1 // pred_fallthru
      _
    // Predicated region
    $region6: #{tpu_custom_call.1} parent=1 // pred_check
      _
    $region7: #{tpu_custom_call.1} parent=1 // pred_check_branch
      %22 = sbr.rel (0) target = $region9
    $region8: #{tpu_custom_call.1} parent=1 // pred_region
      %s24 = ssub.s32 512, 512
      %25 = vsyncadd [#allocation6], %s24
      %s26 = sshll.u32 [#allocation5], 4
      %s27 = int_to_ptr.vmem [resolvable:$true] %s26
      %32 = dma.hbm_to_vmem [thread:$0]  %s1, 512, %s27, [#allocation6], 128, 128, 8
    $region9: #{tpu_custom_call.1} parent=1 // pred_fallthru
      _
    // Predicated region
    $region10: #{tpu_custom_call.1} parent=1 // pred_check
      _
    $region11: #{tpu_custom_call.1} parent=1 // pred_check_branch
      %34 = sbr.rel (0) target = $region13
    $region12: #{tpu_custom_call.1} parent=1 // pred_region
      _
    $region13: #{tpu_custom_call.1} parent=1 // pred_fallthru
      _
    // Predicated region
    $region14: #{tpu_custom_call.1} parent=1 // pred_check
      _
    $region15: #{tpu_custom_call.1} parent=1 // pred_check_branch
      %36 = sbr.rel (0) target = $region17
    $region16: #{tpu_custom_call.1} parent=1 // pred_region
      %37 = dma.done [#allocation3], 128
    $region17: #{tpu_custom_call.1} parent=1 // pred_fallthru
      _
    // Predicated region
    $region18: #{tpu_custom_call.1} parent=1 // pred_check
      _
    $region19: #{tpu_custom_call.1} parent=1 // pred_check_branch
      %39 = sbr.rel (0) target = $region21
    $region20: #{tpu_custom_call.1} parent=1 // pred_region
      %40 = dma.done [#allocation6], 512
    $region21: #{tpu_custom_call.1} parent=1 // pred_fallthru
      _
    %v41 = vld [vmem:[#allocation2] sm:$0xff]
    %v42 = vld [vmem:[#allocation5] sm:$0xff]
    %v43 = vld [vmem:[#allocation5 + $0x8] sm:$0xff]
    %v44 = vld [vmem:[#allocation5 + $0x10] sm:$0xff]
    %v45 = vld [vmem:[#allocation5 + $0x18] sm:$0xff]
    %v46 = vld [vmem:[%s2] sm:$0x1]
    %v48 = vlaneseq
    %v49 = vshrl.u32 %v48, 7
    %v50 = vsub.s32 0, %v49
    %v51 = vrot.slane %v46, %v50
    %vm53 = vcmask 261120
    %v55 = vsel %vm53, %v41, 0
    %57 = vmatprep.subr.mxu0 0.0
    %58 = vmatpush1.msra.mxu0 0.0
    %59 = vmatprep.subr.mxu0 0.0
    %60 = vmatpush1.msra.mxu0 0.0
    %61 = vmatprep.subr.mxu0 0.0
    %62 = vmatpush1.msra.mxu0 0.0
    %63 = vmatprep.subr.mxu0 0.0
    %64 = vmatpush1.msra.mxu0 0.0
    %65 = vmatprep.subr.mxu0 0.0
    %66 = vmatpush1.msra.mxu0 0.0
    %67 = vmatprep.subr.mxu0 0.0
    %68 = vmatpush1.msra.mxu0 0.0
    %69 = vmatprep.subr.mxu0 0.0
    %70 = vmatpush1.msra.mxu0 0.0
    %71 = vmatprep.subr.mxu0 0.0
    %72 = vmatpush1.msra.mxu0 0.0
    %73 = vmatprep.subr.mxu0 0.0
    %74 = vmatpush1.msra.mxu0 0.0
    %75 = vmatprep.subr.mxu0 0.0
    %76 = vmatpush1.msra.mxu0 0.0
    %77 = vmatprep.subr.mxu0 0.0
    %78 = vmatpush1.msra.mxu0 0.0
    %79 = vmatprep.subr.mxu0 0.0
    %80 = vmatpush1.msra.mxu0 0.0
    %81 = vmatprep.subr.mxu0 0.0
    %82 = vmatpush1.msra.mxu0 %v45
    %83 = vmatprep.subr.mxu0 0.0
    %84 = vmatpush1.msra.mxu0 %v44
    %85 = vmatprep.subr.mxu0 0.0
    %86 = vmatpush1.msra.mxu0 %v43
    %87 = vmatprep.subr.mxu0 0.0
    %88 = vmatpush1.msra.mxu0 %v42
    %89 = vmatprep.subr.mxu0 0.0
    %90 = vmatpush2.msra.mxu0 0.0
    %91 = vmatprep.subr.mxu0 0.0
    %92 = vmatpush2.msra.mxu0 0.0
    %93 = vmatprep.subr.mxu0 0.0
    %94 = vmatpush2.msra.mxu0 0.0
    %95 = vmatprep.subr.mxu0 0.0
    %96 = vmatpush2.msra.mxu0 0.0
    %97 = vmatprep.subr.mxu0 0.0
    %98 = vmatpush2.msra.mxu0 0.0
    %99 = vmatprep.subr.mxu0 0.0
    %100 = vmatpush2.msra.mxu0 0.0
    %101 = vmatprep.subr.mxu0 0.0
    %102 = vmatpush2.msra.mxu0 0.0
    %103 = vmatprep.subr.mxu0 0.0
    %104 = vmatpush2.msra.mxu0 0.0
    %105 = vmatprep.subr.mxu0 0.0
    %106 = vmatpush2.msra.mxu0 0.0
    %107 = vmatprep.subr.mxu0 0.0
    %108 = vmatpush2.msra.mxu0 0.0
    %109 = vmatprep.subr.mxu0 0.0
    %110 = vmatpush2.msra.mxu0 0.0
    %111 = vmatprep.subr.mxu0 0.0
    %112 = vmatpush2.msra.mxu0 0.0
    %113 = vmatprep.subr.mxu0 0.0
    %114 = vmatpush2.msra.mxu0 0.0
    %115 = vmatprep.subr.mxu0 0.0
    %116 = vmatpush2.msra.mxu0 0.0
    %117 = vmatprep.subr.mxu0 0.0
    %118 = vmatpush2.msra.mxu0 0.0
    %119 = vmatprep.subr.mxu0 0.0
    %120 = vmatpush2.msra.mxu0 0.0
    %121 = vmatprep.mubr.f32.mxu0 0.0
    %122 = vmatmul.mubr.f32.gmra.mxu0 %v55
    %v123 = vpop.f32.mrf.mxu0
    %v124 = vadd.f32 %v51, %v123
    %v125 = vpop.f32.mrf.mxu0
    %126 = vdwg.mxu0
    %v127 = vxor.u32 %v124, 2147483648
    %v128 = vmul.f32 %v127, 1.442695
    %v129 = vpow.pop %v128
    %v130 = vadd.f32 %v129, 1.0
    %v131 = vrcp.pop %v130
    %v132 = vmul.f32 1.0, %v131
    %v133 = vmul.f32 %v41, %v132
    %v134 = vmul.f32 %v133, %v133
    %v135 = vsel %vm53, %v134, 0.0
    %136 = vadd.xlane.f32.xlu0 %v135
    %v137 = vpop.xlane.xlu0 %136
    %v138 = vmax.f32 %v137, 1e-24
    %v139 = vrsqrt.pop %v138
    %v140 = vmul.f32 %v133, %v139
    %141 = vst.msk [vmem:[#allocation7] sm:$0xff] %vm53, %v140
    // Predicated region
    $region22: #{tpu_custom_call.1} parent=1 // pred_check
      _
    $region23: #{tpu_custom_call.1} parent=1 // pred_check_branch
      %143 = sbr.rel (0) target = $region25
    $region24: #{tpu_custom_call.1} parent=1 // pred_region
      %s145 = ssub.s32 128, 128
      %146 = vsyncadd [#allocation4], %s145
      %s148 = sshll.u32 [#allocation7], 4
      %s149 = int_to_ptr.vmem [resolvable:$true] %s148
      %151 = dma.vmem_to_hbm [thread:$0]  %s149, 128, %s3, [#allocation4]
    $region25: #{tpu_custom_call.1} parent=1 // pred_fallthru
      _
    // Predicated region
    $region26: #{tpu_custom_call.1} parent=1 // pred_check
      _
    $region27: #{tpu_custom_call.1} parent=1 // pred_check_branch
      %153 = sbr.rel (0) target = $region29
    $region28: #{tpu_custom_call.1} parent=1 // pred_region
      %154 = dma.done [#allocation4], 128
    $region29: #{tpu_custom_call.1} parent=1 // pred_fallthru
      _
    %155 = vsyncpa [#allocation3], 1
    %156 = vsyncpa [#allocation6], 1
    %157 = vsyncpa [#allocation4], 1

</llo_original>
